<compile_context>
chip_gen: v7x
topology: tpu7x:2x2x1
jax: 0.10.0
libtpu: 0.0.40
codegen_flags: <defaults>
</compile_context>

<pallas_src>
import jax
import jax.numpy as jnp
from jax import lax
from jax.experimental import pallas as pl
from jax.experimental.pallas import tpu as pltpu


# ----------------------------------------------------------------- helpers --

def _round_up(x, m):
    return ((x + m - 1) // m) * m


def _sublane_pack(dtype):
    """Sublane packing factor (rows per packed vreg) for a dtype."""
    return {4: 8, 2: 16, 1: 32}.get(jnp.dtype(dtype).itemsize, 8)


def _pick_tile(padded, unit, max_tile):
    """Largest multiple of `unit` that divides `padded` and is <= max_tile.

    `padded` must already be a multiple of `unit`; result is >= `unit`.
    """
    q = padded // unit
    max_mult = max(1, max_tile // unit)
    best = 1
    for m in range(1, min(q, max_mult) + 1):
        if q % m == 0:
            best = m
    return best * unit


def _tpu_generation():
    try:
        kind = jax.devices()[0].device_kind.lower()
    except Exception:
        return None
    for tag in ("v7", "v6", "v5"):
        if tag in kind:
            return tag
    return None


def _vmem_capacity_bytes():
    try:
        return int(pltpu.get_tpu_info().vmem_capacity_bytes)
    except Exception:
        # v7x has 64 MiB per TensorCore; earlier generations 128 MiB.
        return (64 << 20) if _tpu_generation() == "v7" else (128 << 20)


# Generation-aware default (tm, tn, tk):
#   v5e ridge ~240 FLOP/B  -> 512^2 tiles are already compute-bound
#   v6e ridge ~650 FLOP/B  -> 1024x1024x512 (~16-28 MiB footprint)
#   v7x ridge ~310 FLOP/B, 64 MiB VMEM -> 512^2 tiles
_TILE_DEFAULTS = {
    "v5": (512, 512, 512),
    "v6": (1024, 1024, 512),
    "v7": (512, 512, 512),
}


# ----------------------------------------------------------------- kernels --
# x_ref: (tm, tk); w_ref: (tk, tn) pre-transposed weight; b_ref: (1, tn) f32.

def _mm_acc_bias_kernel(x_ref, w_ref, b_ref, o_ref, acc_ref):
    k = pl.program_id(2)

    @pl.when(k == 0)
    def _():
        acc_ref[...] = jnp.zeros_like(acc_ref)

    acc_ref[...] += jnp.dot(x_ref[...], w_ref[...],
                            preferred_element_type=jnp.float32)

    @pl.when(k == pl.num_programs(2) - 1)
    def _():
        o_ref[...] = (acc_ref[...] + b_ref[...]).astype(o_ref.dtype)


def _mm_acc_kernel(x_ref, w_ref, o_ref, acc_ref):
    k = pl.program_id(2)

    @pl.when(k == 0)
    def _():
        acc_ref[...] = jnp.zeros_like(acc_ref)

    acc_ref[...] += jnp.dot(x_ref[...], w_ref[...],
                            preferred_element_type=jnp.float32)

    @pl.when(k == pl.num_programs(2) - 1)
    def _():
        o_ref[...] = acc_ref[...].astype(o_ref.dtype)


def _mm_single_bias_kernel(x_ref, w_ref, b_ref, o_ref):
    # K fits in one step: no accumulator scratch, no pl.when epilogue.
    acc = jnp.dot(x_ref[...], w_ref[...], preferred_element_type=jnp.float32)
    o_ref[...] = (acc + b_ref[...]).astype(o_ref.dtype)


def _mm_single_kernel(x_ref, w_ref, o_ref):
    o_ref[...] = jnp.dot(x_ref[...], w_ref[...],
                         preferred_element_type=jnp.float32).astype(o_ref.dtype)


# ------------------------------------------------------------- pallas call --

def _matmul_padded(xp, wT, bp, out_dtype, tm, tn, tk):
    """xp: (Mp, Kp); wT: (Kp, Np); bp: (1, Np) f32 or None.  Dims divisible by tiles."""
    Mp, Kp = xp.shape
    _, Np = wT.shape
    grid = (Mp // tm, Np // tn, Kp // tk)
    multi_k = grid[2] > 1
    have_bias = bp is not None

    in_specs = [
        pl.BlockSpec((tm, tk), lambda i, j, k: (i, k)),   # activation tile
        pl.BlockSpec((tk, tn), lambda i, j, k: (k, j)),   # (K, N) weight tile
    ]
    args = [xp, wT]
    if have_bias:
        in_specs.append(pl.BlockSpec((1, tn), lambda i, j, k: (0, j)))
        args.append(bp)

    if multi_k:
        kernel = _mm_acc_bias_kernel if have_bias else _mm_acc_kernel
        scratch = [pltpu.VMEM((tm, tn), jnp.float32)]
    else:
        kernel = _mm_single_bias_kernel if have_bias else _mm_single_kernel
        scratch = []

    cbytes = jnp.dtype(xp.dtype).itemsize
    obytes = jnp.dtype(out_dtype).itemsize
    tile_bytes = (
        2 * tm * tk * cbytes                      # x tile, double-buffered
        + 2 * tk * tn * cbytes                    # weight tile, double-buffered
        + (2 * tn * 4 if have_bias else 0)        # bias tile
        + 2 * tm * tn * obytes                    # output tile, double-buffered
        + (tm * tn * 4 if multi_k else 0)         # f32 accumulator scratch
    )
    vmem_cap = int(0.65 * _vmem_capacity_bytes())
    vmem_limit = int(min(max(tile_bytes + (8 << 20), 32 << 20), vmem_cap))

    # NOTE: if a trace still shows exposed DMA after tile sizing, add
    # pipeline_mode=pl.Buffered(3) on the x / weight BlockSpecs.
    return pl.pallas_call(
        kernel,
        out_shape=jax.ShapeDtypeStruct((Mp, Np), out_dtype),
        grid_spec=pltpu.PrefetchScalarGridSpec(
            num_scalar_prefetch=0,
            grid=grid,
            in_specs=in_specs,
            out_specs=pl.BlockSpec((tm, tn), lambda i, j, k: (i, j)),
            scratch_shapes=scratch,
        ),
        compiler_params=pltpu.CompilerParams(
            dimension_semantics=("parallel", "parallel", "arbitrary"),
            vmem_limit_bytes=vmem_limit,
        ),
    )(*args)


# -------------------------------------------------------------- module API --

class PallasLinear:
    """Pallas TPU equivalent of the PyTorch `Linear` module (F.linear forward).

    weight: (out_channels, in_channels)  -- PyTorch layout
    bias:   (out_channels,) or None
    compute_dtype: MXU input dtype; default = weight.dtype (f32 parity).
                   Pass jnp.bfloat16 to opt into the fast path.
    """

    _XLA_FALLBACK_MACS = 128 * 128 * 128   # tiny problems -> plain XLA dot

    def __init__(self, weight, bias=None, *, compute_dtype=None,
                 tm=None, tn=None, tk=None):
        weight = jnp.asarray(weight)
        self.out_channels, self.in_channels = weight.shape
        self.compute_dtype = jnp.dtype(
            compute_dtype if compute_dtype is not None else weight.dtype)
        self._tile_override = (tm, tn, tk)
        self._weight = weight                      # for the XLA fallback path
        self._bias = None if bias is None else jnp.asarray(bias)

        N, K = weight.shape
        self._Np = _round_up(N, 128)
        self._Kp = _round_up(K, 128)

        # One-time (hoisted) weight prep: transpose to (K, N) so the kernel
        # contracts the MXU-native orientation, pad to lane alignment, cast.
        wT = jnp.pad(weight.T, ((0, self._Kp - K), (0, self._Np - N)))
        self._wT = wT.astype(self.compute_dtype)

        if bias is not None:
            bp = jnp.asarray(bias).astype(jnp.float32).reshape(1, N)
            self._bp = jnp.pad(bp, ((0, 0), (0, self._Np - N)))
        else:
            self._bp = None

    def __call__(self, x, *, force_pallas=False):
        orig_shape = x.shape
        out_dtype = x.dtype
        K = orig_shape[-1]
        assert K == self.in_channels, (K, self.in_channels)
        N = self.out_channels

        x2 = x.reshape(-1, K)                      # F.linear flattens leading dims
        M = x2.shape[0]

        # Small-problem fallback: pallas_call fixed overhead + pad/cast copies
        # dominate; XLA's fused dot is faster.
        if not force_pallas and M * N * K < self._XLA_FALLBACK_MACS:
            y = jnp.dot(x2, self._weight.T, precision=lax.Precision.HIGHEST)
            if self._bias is not None:
                y = y + self._bias
            return y.astype(out_dtype).reshape(orig_shape[:-1] + (N,))

        cdt = self.compute_dtype
        pack = _sublane_pack(cdt)                  # 8 for f32, 16 for bf16, 32 for int8
        Mp = _round_up(M, pack)
        Kp, Np = self._Kp, self._Np

        gen = _tpu_generation()
        dtm, dtn, dtk = _TILE_DEFAULTS.get(gen, (512, 512, 512))
        tm0, tn0, tk0 = self._tile_override
        tm0 = dtm if tm0 is None else tm0
        tn0 = dtn if tn0 is None else tn0
        tk0 = dtk if tk0 is None else tk0

        # Tiles that divide the hardware-aligned padded dims (no padding to
        # full tile multiples, no wasted MXU work / DMA).
        tm = _pick_tile(Mp, pack, max(pack, tm0))
        tn = _pick_tile(Np, 128, max(128, tn0))
        tk = _pick_tile(Kp, 128, max(128, tk0))

        # v7x has 2 TensorCores: keep >=2 blocks on a parallel axis if possible.
        if gen == "v7" and Mp // tm == 1 and Np // tn == 1:
            if Np > 128:
                tn = _pick_tile(Np, 128, max(128, tn // 2))
            elif Mp > pack:
                tm = _pick_tile(Mp, pack, max(pack, tm // 2))

        xp = x2
        if (Mp, Kp) != (M, K):
            xp = jnp.pad(x2, ((0, Mp - M), (0, Kp - K)))   # K zero-pad is a no-op in the dot
        if xp.dtype != cdt:
            xp = xp.astype(cdt)

        out = _matmul_padded(xp, self._wT, self._bp, out_dtype, tm, tn, tk)
        out = out[:M, :N]
        return out.reshape(orig_shape[:-1] + (N,))


def pallas_linear(x, weight, bias=None, *, force_pallas=False, **kwargs):
    """One-shot functional form (prefer PallasLinear to amortize weight prep)."""
    return PallasLinear(weight, bias, **kwargs)(x, force_pallas=force_pallas)


def glorot_uniform(key, out_channels, in_channels, dtype=jnp.float32):
    # Matches torch_geometric inits.glorot: U(-a, a), a = sqrt(6 / (fan_in + fan_out))
    a = (6.0 / (in_channels + out_channels)) ** 0.5
    return jax.random.uniform(
        key, (out_channels, in_channels), dtype=dtype, minval=-a, maxval=a)


# ------------------------------------------------------------------- demo ---

if __name__ == "__main__":
    key = jax.random.PRNGKey(0)
    k1, k2, k3, k4, k5 = jax.random.split(key, 5)

    # --- module-scale shapes: in=32, out=64, 16 "node" rows ------------------
    in_channels, out_channels, M = 32, 64, 16
    x = jax.random.normal(k1, (M, in_channels), dtype=jnp.float32)
    weight = glorot_uniform(k2, out_channels, in_channels)   # (out, in) like nn.Parameter
    bias = jnp.zeros((out_channels,), dtype=jnp.float32)     # inits.zeros(bias)

    lin = PallasLinear(weight, bias)      # f32 compute (parity with F.linear)
    y_ref = jnp.dot(x, weight.T, precision=lax.Precision.HIGHEST) + bias

    # Force the Pallas path to exercise the kernel (single-K-step variant).
    y = jax.block_until_ready(lin(x, force_pallas=True))
    assert y.shape == (M, out_channels)
    assert jnp.allclose(y, y_ref, atol=1e-3, rtol=1e-3)

    # Default behaviour for tiny problems: XLA fallback.
    y_fb = jax.block_until_ready(lin(x))
    assert jnp.allclose(y_fb, y_ref, atol=1e-3, rtol=1e-3)

    # --- multi-K-step accumulator path, leading batch dims, uneven N ---------
    K2, N2 = 384, 200
    x2 = jax.random.normal(k3, (2, 48, K2), dtype=jnp.float32)   # 96 flattened rows
    w2 = glorot_uniform(k4, N2, K2)
    b2 = jax.random.normal(k5, (N2,), dtype=jnp.float32)
    y2_ref = jnp.einsum("bnk,ok->bno", x2, w2,
                        precision=lax.Precision.HIGHEST) + b2

    lin2 = PallasLinear(w2, b2, tm=32, tn=128, tk=128)   # small tiles -> grid_k = 3
    y2 = jax.block_until_ready(lin2(x2, force_pallas=True))
    assert y2.shape == (2, 48, N2)
    assert jnp.allclose(y2, y2_ref, atol=1e-3, rtol=1e-3)

    # --- explicit bf16 fast path (opt-in), no bias ----------------------------
    lin3 = PallasLinear(w2, None, compute_dtype=jnp.bfloat16)
    y3 = jax.block_until_ready(lin3(x2, force_pallas=True))
    y3_ref = jnp.einsum("bnk,ok->bno", x2, w2, precision=lax.Precision.HIGHEST)
    assert jnp.allclose(y3, y3_ref, atol=5e-2, rtol=5e-2)

    print("KERNEL_OK")
</pallas_src>

<mosaic_0001>
module attributes {stable_mosaic.version = 11 : i64} {
  func.func @_mm_single_bias_kernel(%arg0: i32, %arg1: i32, %arg2: i32, %arg3: memref<16x128xf32, #tpu.memory_space<vmem>>, %arg4: memref<128x128xf32, #tpu.memory_space<vmem>>, %arg5: memref<1x128xf32, #tpu.memory_space<vmem>>, %arg6: memref<16x128xf32, #tpu.memory_space<vmem>>) attributes {dimension_semantics = [#tpu.dimension_semantics<parallel>, #tpu.dimension_semantics<parallel>, #tpu.dimension_semantics<arbitrary>], iteration_bounds = array<i64: 1, 1, 1>, scalar_prefetch = 0 : i64, scratch_operands = 0 : i64, tpu.core_type = #tpu.core_type<tc>, window_params = [{transform_indices = @transform_0, window_bounds = array<i64: 16, 128>}, {transform_indices = @transform_1, window_bounds = array<i64: 128, 128>}, {transform_indices = @transform_2, window_bounds = array<i64: 1, 128>}, {transform_indices = @transform_3, window_bounds = array<i64: 16, 128>}]} {
    %c0 = arith.constant 0 : index
    %c0_0 = arith.constant 0 : index
    %0 = vector.load %arg3[%c0, %c0_0] : memref<16x128xf32, #tpu.memory_space<vmem>>, vector<16x128xf32>
    %c0_1 = arith.constant 0 : index
    %c0_2 = arith.constant 0 : index
    %1 = vector.load %arg4[%c0_1, %c0_2] : memref<128x128xf32, #tpu.memory_space<vmem>>, vector<128x128xf32>
    %cst = arith.constant dense<0.000000e+00> : vector<16x128xf32>
    %2 = tpu.matmul %0, %1, %cst {dimension_numbers = #tpu.dot_dimension_numbers<[1], [0], [0], [1], [0, 0, 1, 1], [], []>} : vector<16x128xf32>, vector<128x128xf32>, vector<16x128xf32> -> vector<16x128xf32>
    %c0_3 = arith.constant 0 : index
    %c0_4 = arith.constant 0 : index
    %3 = vector.load %arg5[%c0_3, %c0_4] : memref<1x128xf32, #tpu.memory_space<vmem>>, vector<1x128xf32>
    %4 = vector.broadcast %3 : vector<1x128xf32> to vector<16x128xf32>
    %5 = arith.addf %2, %4 : vector<16x128xf32>
    %c0_5 = arith.constant 0 : index
    %c0_6 = arith.constant 0 : index
    %6 = vector.load %arg6[%c0_5, %c0_6] : memref<16x128xf32, #tpu.memory_space<vmem>>, vector<16x128xf32>
    tpu.vector_store %arg6[%c0_5, %c0_6], %5 {strides = array<i32>} : memref<16x128xf32, #tpu.memory_space<vmem>>, vector<16x128xf32>,
    return
  }
  func.func @transform_0(%arg0: i32, %arg1: i32, %arg2: i32) -> (i32, i32) {
    %c0_i32 = arith.constant 0 : i32
    return %arg0, %arg2 : i32, i32
  }
  func.func @transform_1(%arg0: i32, %arg1: i32, %arg2: i32) -> (i32, i32) {
    %c0_i32 = arith.constant 0 : i32
    return %arg2, %arg1 : i32, i32
  }
  func.func @transform_2(%arg0: i32, %arg1: i32, %arg2: i32) -> (i32, i32) {
    %c0_i32 = arith.constant 0 : i32
    %c0_i32_0 = arith.constant 0 : i32
    return %c0_i32, %arg1 : i32, i32
  }
  func.func @transform_3(%arg0: i32, %arg1: i32, %arg2: i32) -> (i32, i32) {
    %c0_i32 = arith.constant 0 : i32
    return %arg0, %arg1 : i32, i32
  }
}

</mosaic_0001>

<llo_original>
// kernel: tpu_custom_call.1
$region0: #{tpu_custom_call.1}
  #allocation0 [shape = 'u32[]', space=smem, size = 0x4, offset = 0x4, fixed_abs, tag = 'smem constant byte address 0x4 - core index']
  #allocation1 [shape = 'u32[144,128]{1,0:T(1,128)}', space=vmem, size = 0x12000, scoped, tag = 'internal scratch']
  %s0 = inlined_call_operand.hbm [shape: f32[16,128], index: 0, kind: input, shape index: {}]
  %s1 = inlined_call_operand.hbm [shape: f32[128,128], index: 1, kind: input, shape index: {}]
  %s2 = inlined_call_operand.vmem [shape: f32[1,128], index: 2, kind: input, shape index: {}]
  %s3 = inlined_call_operand.hbm [shape: f32[16,128], index: 3, kind: output, shape index: {}]
  %s4 = sld [smem:[#allocation0]]
  $region30: #{tpu_custom_call.1} parent=0
    _
  %s6 = ssub.s32 1, %s4
  %s7 = scalar_select 0, %s6, %s4
  $region1: #{tpu_custom_call.1} parent=0
    #allocation2 [shape = 'u8[8192]{0}', space=vmem, size = 0x2000, scoped, tag = 'input window, operand 0, single buffered']
    #allocation3 [shape = 's32[1]{0}', space=sflag, size = 0x4, scoped, tag = 'scoped memory for tpu_custom_call.1']
    #allocation4 [shape = 's32[1]{0}', space=sflag, size = 0x4, scoped, tag = 'scoped memory for tpu_custom_call.1']
    #allocation5 [shape = 'u8[65536]{0}', space=vmem, size = 0x10000, scoped, tag = 'input window, operand 1, single buffered']
    #allocation6 [shape = 's32[1]{0}', space=sflag, size = 0x4, scoped, tag = 'scoped memory for tpu_custom_call.1']
    #allocation7 [shape = 'u8[8192]{0}', space=vmem, size = 0x2000, scoped, tag = 'output window, operand 0, single buffered']
    %8 = vsyncpa [#allocation3], 0
    %9 = vsyncpa [#allocation6], 0
    %10 = vsyncpa [#allocation4], 0
    // Predicated region
    $region2: #{tpu_custom_call.1} parent=1 // pred_check
      _
    $region3: #{tpu_custom_call.1} parent=1 // pred_check_branch
      %12 = sbr.rel (0) target = $region5
    $region4: #{tpu_custom_call.1} parent=1 // pred_region
      %s14 = ssub.s32 256, 256
      %15 = vsyncadd [#allocation3], %s14
      %s16 = sshll.u32 [#allocation2], 4
      %s17 = int_to_ptr.vmem [resolvable:$true] %s16
      %22 = dma.hbm_to_vmem [thread:$0]  %s0, 256, %s17, [#allocation3], 128, 128, 8
    $region5: #{tpu_custom_call.1} parent=1 // pred_fallthru
      _
    // Predicated region
    $region6: #{tpu_custom_call.1} parent=1 // pred_check
      _
    $region7: #{tpu_custom_call.1} parent=1 // pred_check_branch
      %24 = sbr.rel (0) target = $region9
    $region8: #{tpu_custom_call.1} parent=1 // pred_region
      %s26 = ssub.s32 2048, 2048
      %27 = vsyncadd [#allocation6], %s26
      %s28 = sshll.u32 [#allocation5], 4
      %s29 = int_to_ptr.vmem [resolvable:$true] %s28
      %34 = dma.hbm_to_vmem [thread:$0]  %s1, 2048, %s29, [#allocation6], 128, 128, 8
    $region9: #{tpu_custom_call.1} parent=1 // pred_fallthru
      _
    // Predicated region
    $region10: #{tpu_custom_call.1} parent=1 // pred_check
      _
    $region11: #{tpu_custom_call.1} parent=1 // pred_check_branch
      %36 = sbr.rel (0) target = $region13
    $region12: #{tpu_custom_call.1} parent=1 // pred_region
      _
    $region13: #{tpu_custom_call.1} parent=1 // pred_fallthru
      _
    // Predicated region
    $region14: #{tpu_custom_call.1} parent=1 // pred_check
      _
    $region15: #{tpu_custom_call.1} parent=1 // pred_check_branch
      %38 = sbr.rel (0) target = $region17
    $region16: #{tpu_custom_call.1} parent=1 // pred_region
      %39 = dma.done [#allocation3], 256
    $region17: #{tpu_custom_call.1} parent=1 // pred_fallthru
      _
    // Predicated region
    $region18: #{tpu_custom_call.1} parent=1 // pred_check
      _
    $region19: #{tpu_custom_call.1} parent=1 // pred_check_branch
      %41 = sbr.rel (0) target = $region21
    $region20: #{tpu_custom_call.1} parent=1 // pred_region
      %42 = dma.done [#allocation6], 2048
    $region21: #{tpu_custom_call.1} parent=1 // pred_fallthru
      _
    %v43 = vld [vmem:[#allocation2] sm:$0xff]
    %v44 = vld [vmem:[#allocation2 + $0x8] sm:$0xff]
    %v45 = vld [vmem:[#allocation5] sm:$0xff]
    %v46 = vld [vmem:[#allocation5 + $0x8] sm:$0xff]
    %v47 = vld [vmem:[#allocation5 + $0x10] sm:$0xff]
    %v48 = vld [vmem:[#allocation5 + $0x18] sm:$0xff]
    %v49 = vld [vmem:[#allocation5 + $0x20] sm:$0xff]
    %v50 = vld [vmem:[#allocation5 + $0x28] sm:$0xff]
    %v51 = vld [vmem:[#allocation5 + $0x30] sm:$0xff]
    %v52 = vld [vmem:[#allocation5 + $0x38] sm:$0xff]
    %v53 = vld [vmem:[#allocation5 + $0x40] sm:$0xff]
    %v54 = vld [vmem:[#allocation5 + $0x48] sm:$0xff]
    %v55 = vld [vmem:[#allocation5 + $0x50] sm:$0xff]
    %v56 = vld [vmem:[#allocation5 + $0x58] sm:$0xff]
    %v57 = vld [vmem:[#allocation5 + $0x60] sm:$0xff]
    %v58 = vld [vmem:[#allocation5 + $0x68] sm:$0xff]
    %v59 = vld [vmem:[#allocation5 + $0x70] sm:$0xff]
    %v60 = vld [vmem:[#allocation5 + $0x78] sm:$0xff]
    %v61 = vld [vmem:[%s2] sm:$0x1]
    %v63 = vlaneseq
    %v64 = vshrl.u32 %v63, 7
    %v65 = vsub.s32 0, %v64
    %v66 = vrot.slane %v61, %v65
    %68 = vmatprep.subr.mxu0 0.0
    %69 = vmatpush1.msra.mxu0 %v45
    %70 = vmatprep.subr.mxu0 0.0
    %71 = vmatpush1.msra.mxu0 %v46
    %72 = vmatprep.subr.mxu0 0.0
    %73 = vmatpush1.msra.mxu0 %v47
    %74 = vmatprep.subr.mxu0 0.0
    %75 = vmatpush1.msra.mxu0 %v48
    %76 = vmatprep.subr.mxu0 0.0
    %77 = vmatpush1.msra.mxu0 %v49
    %78 = vmatprep.subr.mxu0 0.0
    %79 = vmatpush1.msra.mxu0 %v50
    %80 = vmatprep.subr.mxu0 0.0
    %81 = vmatpush1.msra.mxu0 %v51
    %82 = vmatprep.subr.mxu0 0.0
    %83 = vmatpush1.msra.mxu0 %v52
    %84 = vmatprep.subr.mxu0 0.0
    %85 = vmatpush1.msra.mxu0 %v53
    %86 = vmatprep.subr.mxu0 0.0
    %87 = vmatpush1.msra.mxu0 %v54
    %88 = vmatprep.subr.mxu0 0.0
    %89 = vmatpush1.msra.mxu0 %v55
    %90 = vmatprep.subr.mxu0 0.0
    %91 = vmatpush1.msra.mxu0 %v56
    %92 = vmatprep.subr.mxu0 0.0
    %93 = vmatpush1.msra.mxu0 %v57
    %94 = vmatprep.subr.mxu0 0.0
    %95 = vmatpush1.msra.mxu0 %v58
    %96 = vmatprep.subr.mxu0 0.0
    %97 = vmatpush1.msra.mxu0 %v59
    %98 = vmatprep.subr.mxu0 0.0
    %99 = vmatpush1.msra.mxu0 %v60
    %100 = vmatprep.subr.mxu0 0.0
    %101 = vmatpush1.msra.mxu0 0.0
    %102 = vmatprep.subr.mxu0 0.0
    %103 = vmatpush1.msra.mxu0 0.0
    %104 = vmatprep.subr.mxu0 0.0
    %105 = vmatpush1.msra.mxu0 0.0
    %106 = vmatprep.subr.mxu0 0.0
    %107 = vmatpush1.msra.mxu0 0.0
    %108 = vmatprep.subr.mxu0 0.0
    %109 = vmatpush1.msra.mxu0 0.0
    %110 = vmatprep.subr.mxu0 0.0
    %111 = vmatpush1.msra.mxu0 0.0
    %112 = vmatprep.subr.mxu0 0.0
    %113 = vmatpush1.msra.mxu0 0.0
    %114 = vmatprep.subr.mxu0 0.0
    %115 = vmatpush1.msra.mxu0 0.0
    %116 = vmatprep.subr.mxu0 0.0
    %117 = vmatpush1.msra.mxu0 0.0
    %118 = vmatprep.subr.mxu0 0.0
    %119 = vmatpush1.msra.mxu0 0.0
    %120 = vmatprep.subr.mxu0 0.0
    %121 = vmatpush1.msra.mxu0 0.0
    %122 = vmatprep.subr.mxu0 0.0
    %123 = vmatpush1.msra.mxu0 0.0
    %124 = vmatprep.subr.mxu0 0.0
    %125 = vmatpush1.msra.mxu0 0.0
    %126 = vmatprep.subr.mxu0 0.0
    %127 = vmatpush1.msra.mxu0 0.0
    %128 = vmatprep.subr.mxu0 0.0
    %129 = vmatpush1.msra.mxu0 0.0
    %130 = vmatprep.subr.mxu0 0.0
    %131 = vmatpush1.msra.mxu0 0.0
    %132 = vmatprep.mubr.f32.mxu0 0.0
    %133 = vmatmul.mubr.f32.gmra.mrb[0].mxu0 %v43
    %v134 = vpop.f32.mrb[0].mxu0
    %v135 = vadd.f32 %v66, %v134
    %v136 = vpop.f32.mrb[0].mxu0
    %137 = vmatprep.mubr.f32.mxu0 0.0
    %138 = vmatmul.mubr.f32.gmra.mrb[0].mxu0 %v44
    %v139 = vpop.f32.mrb[0].mxu0
    %v140 = vadd.f32 %v66, %v139
    %v141 = vpop.f32.mrb[0].mxu0
    %142 = vdwg.mxu0
    %143 = vst [vmem:[#allocation7] sm:$0xff] %v135
    %144 = vst [vmem:[#allocation7 + $0x8] sm:$0xff] %v140
    // Predicated region
    $region22: #{tpu_custom_call.1} parent=1 // pred_check
      _
    $region23: #{tpu_custom_call.1} parent=1 // pred_check_branch
      %146 = sbr.rel (0) target = $region25
    $region24: #{tpu_custom_call.1} parent=1 // pred_region
      %s148 = ssub.s32 256, 256
      %149 = vsyncadd [#allocation4], %s148
      %s150 = sshll.u32 [#allocation7], 4
      %s151 = int_to_ptr.vmem [resolvable:$true] %s150
      %156 = dma.vmem_to_hbm [thread:$0]  %s151, 256, %s3, [#allocation4], 128, 128, 8
    $region25: #{tpu_custom_call.1} parent=1 // pred_fallthru
      _
    // Predicated region
    $region26: #{tpu_custom_call.1} parent=1 // pred_check
      _
    $region27: #{tpu_custom_call.1} parent=1 // pred_check_branch
      %158 = sbr.rel (0) target = $region29
    $region28: #{tpu_custom_call.1} parent=1 // pred_region
      %159 = dma.done [#allocation4], 256
    $region29: #{tpu_custom_call.1} parent=1 // pred_fallthru
      _
    %160 = vsyncpa [#allocation3], 1
    %161 = vsyncpa [#allocation6], 1
    %162 = vsyncpa [#allocation4], 1

</llo_original>
